<compile_context>
chip_gen: v7x
topology: tpu7x:2x2x1
jax: 0.10.0
libtpu: 0.0.40
codegen_flags: <defaults>
</compile_context>

<pallas_src>
import math
from functools import partial

import numpy as np
import jax
import jax.numpy as jnp
from jax.experimental import pallas as pl
from jax.experimental.pallas import tpu as pltpu


# ----------------------------------------------------------------------------
# Pallas kernel: gather `rows_per_block` rows of the HBM embedding table into
# the current lane-dense output block via concurrent async copies.
# ----------------------------------------------------------------------------
def _embedding_gather_kernel(ids_ref, table_hbm, out_ref, sem, *, rows_per_block):
    # ids_ref:   SMEM (B_padded,) int32   (scalar prefetch)
    # table_hbm: HBM  (V, D)              (memory_space=pl.ANY, manual DMA)
    # out_ref:   VMEM (rows_per_block, D) output block
    # sem:       DMA semaphores, shape (rows_per_block,)
    base = pl.program_id(0) * rows_per_block
    copies = []
    for i in range(rows_per_block):          # static unroll; rows_per_block is small
        idx = ids_ref[base + i]              # scalar read from SMEM
        cp = pltpu.make_async_copy(
            table_hbm.at[pl.ds(idx, 1)],     # (1, D) row in HBM, data-dependent
            out_ref.at[pl.ds(i, 1)],         # (1, D) row of the output block
            sem.at[i],
        )
        cp.start()                           # issue all DMAs first (they overlap)
        copies.append(cp)
    for cp in copies:
        cp.wait()


# ----------------------------------------------------------------------------
# Wrapper
# ----------------------------------------------------------------------------
def embedding_lookup_pallas(ids, table, *, rows_per_block=8):
    """ids: (B,) int -> (B, D) rows gathered from table (V, D)."""
    B = ids.shape[0]
    V, D = table.shape
    ids = ids.astype(jnp.int32)

    n_blocks = pl.cdiv(B, rows_per_block)
    Bp = n_blocks * rows_per_block
    if Bp != B:
        # Pad with a valid index (0); padded rows are sliced off below.
        ids = jnp.concatenate([ids, jnp.zeros((Bp - B,), jnp.int32)])

    kernel = partial(_embedding_gather_kernel, rows_per_block=rows_per_block)
    out = pl.pallas_call(
        kernel,
        out_shape=jax.ShapeDtypeStruct((Bp, D), table.dtype),
        grid_spec=pltpu.PrefetchScalarGridSpec(
            num_scalar_prefetch=1,                       # ids land in SMEM
            grid=(n_blocks,),
            in_specs=[pl.BlockSpec(memory_space=pl.ANY)],  # table stays in HBM
            out_specs=pl.BlockSpec((rows_per_block, D),
                                   lambda b, ids: (b, 0)),
            scratch_shapes=[pltpu.SemaphoreType.DMA((rows_per_block,))],
        ),
        compiler_params=pltpu.CompilerParams(
            dimension_semantics=("parallel",)),          # v7x: split blocks over 2 TCs
    )(ids, table)
    return out[:B]


# ----------------------------------------------------------------------------
# Module
# ----------------------------------------------------------------------------
class AbstractEmbModel:
    def __init__(self):
        self._is_trainable = None
        self._ucg_rate = None
        self._input_key = None

    @property
    def is_trainable(self):
        return self._is_trainable

    @is_trainable.setter
    def is_trainable(self, value):
        self._is_trainable = value

    @property
    def ucg_rate(self):
        return self._ucg_rate

    @ucg_rate.setter
    def ucg_rate(self, value):
        self._ucg_rate = value

    @property
    def input_key(self):
        return self._input_key

    @input_key.setter
    def input_key(self, value):
        self._input_key = value


class AdaLNZeroEmbedder(AbstractEmbModel):
    def __init__(self, embed_dim, n_classes=1000, add_sequence_dim=False,
                 param_key=None):
        super().__init__()
        if param_key is None:
            param_key = jax.random.PRNGKey(42)
        # nn.Embedding default init: N(0, 1). Table has n_classes + 1 rows
        # (extra row is the unconditional / null class).
        self.embedding = jax.random.normal(
            param_key, (n_classes + 1, embed_dim), dtype=jnp.float32)
        self.n_classes = n_classes
        self.add_sequence_dim = add_sequence_dim

    def __call__(self, c):
        c = embedding_lookup_pallas(c, self.embedding)
        if self.add_sequence_dim:
            c = c[:, None, :]
        return c

    def forward(self, c):
        return self(c)

    def get_unconditional_conditioning(self, bs):
        uc_class = self.n_classes
        uc = jnp.full((bs,), uc_class, dtype=jnp.int32)
        # TODO(synk): original code indexes the dict with `self.key` (a bug in
        # the PyTorch source); we use `input_key` here.
        return {self.input_key: uc}


# ----------------------------------------------------------------------------
if __name__ == "__main__":
    key = jax.random.PRNGKey(0)
    k_ids, k_emb = jax.random.split(key)

    n_classes = 1000
    embed_dim = 256
    B = 2

    ids = jax.random.randint(k_ids, (B,), 0, n_classes + 1, dtype=jnp.int32)

    # add_sequence_dim=True path
    model = AdaLNZeroEmbedder(embed_dim, n_classes=n_classes,
                              add_sequence_dim=True, param_key=k_emb)
    y = jax.block_until_ready(model(ids))
    ref = jnp.take(model.embedding, ids, axis=0)[:, None, :]
    assert y.shape == (B, 1, embed_dim), y.shape
    np.testing.assert_allclose(np.asarray(y), np.asarray(ref), rtol=0, atol=0)

    # Unconditional path (gathers the extra row n_classes) with a non-multiple
    # of rows_per_block batch to exercise padding, add_sequence_dim=False.
    model2 = AdaLNZeroEmbedder(embed_dim, n_classes=n_classes,
                               add_sequence_dim=False, param_key=k_emb)
    uc = jnp.full((3,), n_classes, dtype=jnp.int32)
    y2 = jax.block_until_ready(model2(uc))
    ref2 = jnp.take(model2.embedding, uc, axis=0)
    assert y2.shape == (3, embed_dim), y2.shape
    np.testing.assert_allclose(np.asarray(y2), np.asarray(ref2), rtol=0, atol=0)

    print("KERNEL_OK")
</pallas_src>

<mosaic_0001>
module attributes {stable_mosaic.version = 11 : i64} {
  func.func @_embedding_gather_kernel(%arg0: i32, %arg1: memref<8xi32, #tpu.memory_space<smem>>, %arg2: memref<1001x256xf32, #tpu.memory_space<any>>, %arg3: memref<8x256xf32, #tpu.memory_space<vmem>>, %arg4: memref<8x!tpu.dma_semaphore, #tpu.memory_space<semaphore_mem>>) attributes {dimension_semantics = [#tpu.dimension_semantics<parallel>], iteration_bounds = array<i64: 1>, scalar_prefetch = 1 : i64, scratch_operands = 1 : i64, tpu.core_type = #tpu.core_type<tc>, window_params = [{}, {transform_indices = @transform_1, window_bounds = array<i64: 8, 256>}]} {
    %c8_i32 = arith.constant 8 : i32
    %0 = arith.muli %arg0, %c8_i32 : i32
    %c0_i32 = arith.constant 0 : i32
    %1 = arith.addi %0, %c0_i32 : i32
    %2 = arith.index_cast %1 : i32 to index
    %3 = memref.load %arg1[%2] : memref<8xi32, #tpu.memory_space<smem>>
    %c0_i32_0 = arith.constant 0 : i32
    %c0_i32_1 = arith.constant 0 : i32
    %4 = tpu.memref_slice %arg2[%3, %c0_i32_1] : memref<1001x256xf32, #tpu.memory_space<any>> -> memref<1x256xf32, #tpu.memory_space<any>>
    %c0_i32_2 = arith.constant 0 : i32
    %c0_i32_3 = arith.constant 0 : i32
    %5 = tpu.memref_slice %arg3[%c0_i32_2, %c0_i32_3] : memref<8x256xf32, #tpu.memory_space<vmem>> -> memref<1x256xf32, #tpu.memory_space<vmem>>
    %6 = tpu.memref_slice %arg4[%c0_i32_0] : memref<8x!tpu.dma_semaphore, #tpu.memory_space<semaphore_mem>> -> memref<1x!tpu.dma_semaphore, #tpu.memory_space<semaphore_mem>>
    %7 = tpu.memref_squeeze %6 : memref<1x!tpu.dma_semaphore, #tpu.memory_space<semaphore_mem>> -> memref<!tpu.dma_semaphore, #tpu.memory_space<semaphore_mem>>
    tpu.enqueue_dma source(%4 : memref<1x256xf32, #tpu.memory_space<any>>) target(%5 : memref<1x256xf32, #tpu.memory_space<vmem>>) target_semaphore(%7 : memref<!tpu.dma_semaphore, #tpu.memory_space<semaphore_mem>>)
    %c1_i32 = arith.constant 1 : i32
    %8 = arith.addi %0, %c1_i32 : i32
    %9 = arith.index_cast %8 : i32 to index
    %10 = memref.load %arg1[%9] : memref<8xi32, #tpu.memory_space<smem>>
    %c1_i32_4 = arith.constant 1 : i32
    %c0_i32_5 = arith.constant 0 : i32
    %11 = tpu.memref_slice %arg2[%10, %c0_i32_5] : memref<1001x256xf32, #tpu.memory_space<any>> -> memref<1x256xf32, #tpu.memory_space<any>>
    %c1_i32_6 = arith.constant 1 : i32
    %c0_i32_7 = arith.constant 0 : i32
    %12 = tpu.memref_slice %arg3[%c1_i32_6, %c0_i32_7] : memref<8x256xf32, #tpu.memory_space<vmem>> -> memref<1x256xf32, #tpu.memory_space<vmem>>
    %13 = tpu.memref_slice %arg4[%c1_i32_4] : memref<8x!tpu.dma_semaphore, #tpu.memory_space<semaphore_mem>> -> memref<1x!tpu.dma_semaphore, #tpu.memory_space<semaphore_mem>>
    %14 = tpu.memref_squeeze %13 : memref<1x!tpu.dma_semaphore, #tpu.memory_space<semaphore_mem>> -> memref<!tpu.dma_semaphore, #tpu.memory_space<semaphore_mem>>
    tpu.enqueue_dma source(%11 : memref<1x256xf32, #tpu.memory_space<any>>) target(%12 : memref<1x256xf32, #tpu.memory_space<vmem>>) target_semaphore(%14 : memref<!tpu.dma_semaphore, #tpu.memory_space<semaphore_mem>>)
    %c2_i32 = arith.constant 2 : i32
    %15 = arith.addi %0, %c2_i32 : i32
    %16 = arith.index_cast %15 : i32 to index
    %17 = memref.load %arg1[%16] : memref<8xi32, #tpu.memory_space<smem>>
    %c2_i32_8 = arith.constant 2 : i32
    %c0_i32_9 = arith.constant 0 : i32
    %18 = tpu.memref_slice %arg2[%17, %c0_i32_9] : memref<1001x256xf32, #tpu.memory_space<any>> -> memref<1x256xf32, #tpu.memory_space<any>>
    %c2_i32_10 = arith.constant 2 : i32
    %c0_i32_11 = arith.constant 0 : i32
    %19 = tpu.memref_slice %arg3[%c2_i32_10, %c0_i32_11] : memref<8x256xf32, #tpu.memory_space<vmem>> -> memref<1x256xf32, #tpu.memory_space<vmem>>
    %20 = tpu.memref_slice %arg4[%c2_i32_8] : memref<8x!tpu.dma_semaphore, #tpu.memory_space<semaphore_mem>> -> memref<1x!tpu.dma_semaphore, #tpu.memory_space<semaphore_mem>>
    %21 = tpu.memref_squeeze %20 : memref<1x!tpu.dma_semaphore, #tpu.memory_space<semaphore_mem>> -> memref<!tpu.dma_semaphore, #tpu.memory_space<semaphore_mem>>
    tpu.enqueue_dma source(%18 : memref<1x256xf32, #tpu.memory_space<any>>) target(%19 : memref<1x256xf32, #tpu.memory_space<vmem>>) target_semaphore(%21 : memref<!tpu.dma_semaphore, #tpu.memory_space<semaphore_mem>>)
    %c3_i32 = arith.constant 3 : i32
    %22 = arith.addi %0, %c3_i32 : i32
    %23 = arith.index_cast %22 : i32 to index
    %24 = memref.load %arg1[%23] : memref<8xi32, #tpu.memory_space<smem>>
    %c3_i32_12 = arith.constant 3 : i32
    %c0_i32_13 = arith.constant 0 : i32
    %25 = tpu.memref_slice %arg2[%24, %c0_i32_13] : memref<1001x256xf32, #tpu.memory_space<any>> -> memref<1x256xf32, #tpu.memory_space<any>>
    %c3_i32_14 = arith.constant 3 : i32
    %c0_i32_15 = arith.constant 0 : i32
    %26 = tpu.memref_slice %arg3[%c3_i32_14, %c0_i32_15] : memref<8x256xf32, #tpu.memory_space<vmem>> -> memref<1x256xf32, #tpu.memory_space<vmem>>
    %27 = tpu.memref_slice %arg4[%c3_i32_12] : memref<8x!tpu.dma_semaphore, #tpu.memory_space<semaphore_mem>> -> memref<1x!tpu.dma_semaphore, #tpu.memory_space<semaphore_mem>>
    %28 = tpu.memref_squeeze %27 : memref<1x!tpu.dma_semaphore, #tpu.memory_space<semaphore_mem>> -> memref<!tpu.dma_semaphore, #tpu.memory_space<semaphore_mem>>
    tpu.enqueue_dma source(%25 : memref<1x256xf32, #tpu.memory_space<any>>) target(%26 : memref<1x256xf32, #tpu.memory_space<vmem>>) target_semaphore(%28 : memref<!tpu.dma_semaphore, #tpu.memory_space<semaphore_mem>>)
    %c4_i32 = arith.constant 4 : i32
    %29 = arith.addi %0, %c4_i32 : i32
    %30 = arith.index_cast %29 : i32 to index
    %31 = memref.load %arg1[%30] : memref<8xi32, #tpu.memory_space<smem>>
    %c4_i32_16 = arith.constant 4 : i32
    %c0_i32_17 = arith.constant 0 : i32
    %32 = tpu.memref_slice %arg2[%31, %c0_i32_17] : memref<1001x256xf32, #tpu.memory_space<any>> -> memref<1x256xf32, #tpu.memory_space<any>>
    %c4_i32_18 = arith.constant 4 : i32
    %c0_i32_19 = arith.constant 0 : i32
    %33 = tpu.memref_slice %arg3[%c4_i32_18, %c0_i32_19] : memref<8x256xf32, #tpu.memory_space<vmem>> -> memref<1x256xf32, #tpu.memory_space<vmem>>
    %34 = tpu.memref_slice %arg4[%c4_i32_16] : memref<8x!tpu.dma_semaphore, #tpu.memory_space<semaphore_mem>> -> memref<1x!tpu.dma_semaphore, #tpu.memory_space<semaphore_mem>>
    %35 = tpu.memref_squeeze %34 : memref<1x!tpu.dma_semaphore, #tpu.memory_space<semaphore_mem>> -> memref<!tpu.dma_semaphore, #tpu.memory_space<semaphore_mem>>
    tpu.enqueue_dma source(%32 : memref<1x256xf32, #tpu.memory_space<any>>) target(%33 : memref<1x256xf32, #tpu.memory_space<vmem>>) target_semaphore(%35 : memref<!tpu.dma_semaphore, #tpu.memory_space<semaphore_mem>>)
    %c5_i32 = arith.constant 5 : i32
    %36 = arith.addi %0, %c5_i32 : i32
    %37 = arith.index_cast %36 : i32 to index
    %38 = memref.load %arg1[%37] : memref<8xi32, #tpu.memory_space<smem>>
    %c5_i32_20 = arith.constant 5 : i32
    %c0_i32_21 = arith.constant 0 : i32
    %39 = tpu.memref_slice %arg2[%38, %c0_i32_21] : memref<1001x256xf32, #tpu.memory_space<any>> -> memref<1x256xf32, #tpu.memory_space<any>>
    %c5_i32_22 = arith.constant 5 : i32
    %c0_i32_23 = arith.constant 0 : i32
    %40 = tpu.memref_slice %arg3[%c5_i32_22, %c0_i32_23] : memref<8x256xf32, #tpu.memory_space<vmem>> -> memref<1x256xf32, #tpu.memory_space<vmem>>
    %41 = tpu.memref_slice %arg4[%c5_i32_20] : memref<8x!tpu.dma_semaphore, #tpu.memory_space<semaphore_mem>> -> memref<1x!tpu.dma_semaphore, #tpu.memory_space<semaphore_mem>>
    %42 = tpu.memref_squeeze %41 : memref<1x!tpu.dma_semaphore, #tpu.memory_space<semaphore_mem>> -> memref<!tpu.dma_semaphore, #tpu.memory_space<semaphore_mem>>
    tpu.enqueue_dma source(%39 : memref<1x256xf32, #tpu.memory_space<any>>) target(%40 : memref<1x256xf32, #tpu.memory_space<vmem>>) target_semaphore(%42 : memref<!tpu.dma_semaphore, #tpu.memory_space<semaphore_mem>>)
    %c6_i32 = arith.constant 6 : i32
    %43 = arith.addi %0, %c6_i32 : i32
    %44 = arith.index_cast %43 : i32 to index
    %45 = memref.load %arg1[%44] : memref<8xi32, #tpu.memory_space<smem>>
    %c6_i32_24 = arith.constant 6 : i32
    %c0_i32_25 = arith.constant 0 : i32
    %46 = tpu.memref_slice %arg2[%45, %c0_i32_25] : memref<1001x256xf32, #tpu.memory_space<any>> -> memref<1x256xf32, #tpu.memory_space<any>>
    %c6_i32_26 = arith.constant 6 : i32
    %c0_i32_27 = arith.constant 0 : i32
    %47 = tpu.memref_slice %arg3[%c6_i32_26, %c0_i32_27] : memref<8x256xf32, #tpu.memory_space<vmem>> -> memref<1x256xf32, #tpu.memory_space<vmem>>
    %48 = tpu.memref_slice %arg4[%c6_i32_24] : memref<8x!tpu.dma_semaphore, #tpu.memory_space<semaphore_mem>> -> memref<1x!tpu.dma_semaphore, #tpu.memory_space<semaphore_mem>>
    %49 = tpu.memref_squeeze %48 : memref<1x!tpu.dma_semaphore, #tpu.memory_space<semaphore_mem>> -> memref<!tpu.dma_semaphore, #tpu.memory_space<semaphore_mem>>
    tpu.enqueue_dma source(%46 : memref<1x256xf32, #tpu.memory_space<any>>) target(%47 : memref<1x256xf32, #tpu.memory_space<vmem>>) target_semaphore(%49 : memref<!tpu.dma_semaphore, #tpu.memory_space<semaphore_mem>>)
    %c7_i32 = arith.constant 7 : i32
    %50 = arith.addi %0, %c7_i32 : i32
    %51 = arith.index_cast %50 : i32 to index
    %52 = memref.load %arg1[%51] : memref<8xi32, #tpu.memory_space<smem>>
    %c7_i32_28 = arith.constant 7 : i32
    %c0_i32_29 = arith.constant 0 : i32
    %53 = tpu.memref_slice %arg2[%52, %c0_i32_29] : memref<1001x256xf32, #tpu.memory_space<any>> -> memref<1x256xf32, #tpu.memory_space<any>>
    %c7_i32_30 = arith.constant 7 : i32
    %c0_i32_31 = arith.constant 0 : i32
    %54 = tpu.memref_slice %arg3[%c7_i32_30, %c0_i32_31] : memref<8x256xf32, #tpu.memory_space<vmem>> -> memref<1x256xf32, #tpu.memory_space<vmem>>
    %55 = tpu.memref_slice %arg4[%c7_i32_28] : memref<8x!tpu.dma_semaphore, #tpu.memory_space<semaphore_mem>> -> memref<1x!tpu.dma_semaphore, #tpu.memory_space<semaphore_mem>>
    %56 = tpu.memref_squeeze %55 : memref<1x!tpu.dma_semaphore, #tpu.memory_space<semaphore_mem>> -> memref<!tpu.dma_semaphore, #tpu.memory_space<semaphore_mem>>
    tpu.enqueue_dma source(%53 : memref<1x256xf32, #tpu.memory_space<any>>) target(%54 : memref<1x256xf32, #tpu.memory_space<vmem>>) target_semaphore(%56 : memref<!tpu.dma_semaphore, #tpu.memory_space<semaphore_mem>>)
    %c0_i32_32 = arith.constant 0 : i32
    %c0_i32_33 = arith.constant 0 : i32
    %57 = tpu.memref_slice %arg2[%3, %c0_i32_33] : memref<1001x256xf32, #tpu.memory_space<any>> -> memref<1x256xf32, #tpu.memory_space<any>>
    %c0_i32_34 = arith.constant 0 : i32
    %c0_i32_35 = arith.constant 0 : i32
    %58 = tpu.memref_slice %arg3[%c0_i32_34, %c0_i32_35] : memref<8x256xf32, #tpu.memory_space<vmem>> -> memref<1x256xf32, #tpu.memory_space<vmem>>
    %59 = tpu.memref_slice %arg4[%c0_i32_32] : memref<8x!tpu.dma_semaphore, #tpu.memory_space<semaphore_mem>> -> memref<1x!tpu.dma_semaphore, #tpu.memory_space<semaphore_mem>>
    %60 = tpu.memref_squeeze %59 : memref<1x!tpu.dma_semaphore, #tpu.memory_space<semaphore_mem>> -> memref<!tpu.dma_semaphore, #tpu.memory_space<semaphore_mem>>
    tpu.wait_dma2 semaphore(%60 : memref<!tpu.dma_semaphore, #tpu.memory_space<semaphore_mem>>) src(%57 : memref<1x256xf32, #tpu.memory_space<any>>) dst(%58 : memref<1x256xf32, #tpu.memory_space<vmem>>)
    %c1_i32_36 = arith.constant 1 : i32
    %c0_i32_37 = arith.constant 0 : i32
    %61 = tpu.memref_slice %arg2[%10, %c0_i32_37] : memref<1001x256xf32, #tpu.memory_space<any>> -> memref<1x256xf32, #tpu.memory_space<any>>
    %c1_i32_38 = arith.constant 1 : i32
    %c0_i32_39 = arith.constant 0 : i32
    %62 = tpu.memref_slice %arg3[%c1_i32_38, %c0_i32_39] : memref<8x256xf32, #tpu.memory_space<vmem>> -> memref<1x256xf32, #tpu.memory_space<vmem>>
    %63 = tpu.memref_slice %arg4[%c1_i32_36] : memref<8x!tpu.dma_semaphore, #tpu.memory_space<semaphore_mem>> -> memref<1x!tpu.dma_semaphore, #tpu.memory_space<semaphore_mem>>
    %64 = tpu.memref_squeeze %63 : memref<1x!tpu.dma_semaphore, #tpu.memory_space<semaphore_mem>> -> memref<!tpu.dma_semaphore, #tpu.memory_space<semaphore_mem>>
    tpu.wait_dma2 semaphore(%64 : memref<!tpu.dma_semaphore, #tpu.memory_space<semaphore_mem>>) src(%61 : memref<1x256xf32, #tpu.memory_space<any>>) dst(%62 : memref<1x256xf32, #tpu.memory_space<vmem>>)
    %c2_i32_40 = arith.constant 2 : i32
    %c0_i32_41 = arith.constant 0 : i32
    %65 = tpu.memref_slice %arg2[%17, %c0_i32_41] : memref<1001x256xf32, #tpu.memory_space<any>> -> memref<1x256xf32, #tpu.memory_space<any>>
    %c2_i32_42 = arith.constant 2 : i32
    %c0_i32_43 = arith.constant 0 : i32
    %66 = tpu.memref_slice %arg3[%c2_i32_42, %c0_i32_43] : memref<8x256xf32, #tpu.memory_space<vmem>> -> memref<1x256xf32, #tpu.memory_space<vmem>>
    %67 = tpu.memref_slice %arg4[%c2_i32_40] : memref<8x!tpu.dma_semaphore, #tpu.memory_space<semaphore_mem>> -> memref<1x!tpu.dma_semaphore, #tpu.memory_space<semaphore_mem>>
    %68 = tpu.memref_squeeze %67 : memref<1x!tpu.dma_semaphore, #tpu.memory_space<semaphore_mem>> -> memref<!tpu.dma_semaphore, #tpu.memory_space<semaphore_mem>>
    tpu.wait_dma2 semaphore(%68 : memref<!tpu.dma_semaphore, #tpu.memory_space<semaphore_mem>>) src(%65 : memref<1x256xf32, #tpu.memory_space<any>>) dst(%66 : memref<1x256xf32, #tpu.memory_space<vmem>>)
    %c3_i32_44 = arith.constant 3 : i32
    %c0_i32_45 = arith.constant 0 : i32
    %69 = tpu.memref_slice %arg2[%24, %c0_i32_45] : memref<1001x256xf32, #tpu.memory_space<any>> -> memref<1x256xf32, #tpu.memory_space<any>>
    %c3_i32_46 = arith.constant 3 : i32
    %c0_i32_47 = arith.constant 0 : i32
    %70 = tpu.memref_slice %arg3[%c3_i32_46, %c0_i32_47] : memref<8x256xf32, #tpu.memory_space<vmem>> -> memref<1x256xf32, #tpu.memory_space<vmem>>
    %71 = tpu.memref_slice %arg4[%c3_i32_44] : memref<8x!tpu.dma_semaphore, #tpu.memory_space<semaphore_mem>> -> memref<1x!tpu.dma_semaphore, #tpu.memory_space<semaphore_mem>>
    %72 = tpu.memref_squeeze %71 : memref<1x!tpu.dma_semaphore, #tpu.memory_space<semaphore_mem>> -> memref<!tpu.dma_semaphore, #tpu.memory_space<semaphore_mem>>
    tpu.wait_dma2 semaphore(%72 : memref<!tpu.dma_semaphore, #tpu.memory_space<semaphore_mem>>) src(%69 : memref<1x256xf32, #tpu.memory_space<any>>) dst(%70 : memref<1x256xf32, #tpu.memory_space<vmem>>)
    %c4_i32_48 = arith.constant 4 : i32
    %c0_i32_49 = arith.constant 0 : i32
    %73 = tpu.memref_slice %arg2[%31, %c0_i32_49] : memref<1001x256xf32, #tpu.memory_space<any>> -> memref<1x256xf32, #tpu.memory_space<any>>
    %c4_i32_50 = arith.constant 4 : i32
    %c0_i32_51 = arith.constant 0 : i32
    %74 = tpu.memref_slice %arg3[%c4_i32_50, %c0_i32_51] : memref<8x256xf32, #tpu.memory_space<vmem>> -> memref<1x256xf32, #tpu.memory_space<vmem>>
    %75 = tpu.memref_slice %arg4[%c4_i32_48] : memref<8x!tpu.dma_semaphore, #tpu.memory_space<semaphore_mem>> -> memref<1x!tpu.dma_semaphore, #tpu.memory_space<semaphore_mem>>
    %76 = tpu.memref_squeeze %75 : memref<1x!tpu.dma_semaphore, #tpu.memory_space<semaphore_mem>> -> memref<!tpu.dma_semaphore, #tpu.memory_space<semaphore_mem>>
    tpu.wait_dma2 semaphore(%76 : memref<!tpu.dma_semaphore, #tpu.memory_space<semaphore_mem>>) src(%73 : memref<1x256xf32, #tpu.memory_space<any>>) dst(%74 : memref<1x256xf32, #tpu.memory_space<vmem>>)
    %c5_i32_52 = arith.constant 5 : i32
    %c0_i32_53 = arith.constant 0 : i32
    %77 = tpu.memref_slice %arg2[%38, %c0_i32_53] : memref<1001x256xf32, #tpu.memory_space<any>> -> memref<1x256xf32, #tpu.memory_space<any>>
    %c5_i32_54 = arith.constant 5 : i32
    %c0_i32_55 = arith.constant 0 : i32
    %78 = tpu.memref_slice %arg3[%c5_i32_54, %c0_i32_55] : memref<8x256xf32, #tpu.memory_space<vmem>> -> memref<1x256xf32, #tpu.memory_space<vmem>>
    %79 = tpu.memref_slice %arg4[%c5_i32_52] : memref<8x!tpu.dma_semaphore, #tpu.memory_space<semaphore_mem>> -> memref<1x!tpu.dma_semaphore, #tpu.memory_space<semaphore_mem>>
    %80 = tpu.memref_squeeze %79 : memref<1x!tpu.dma_semaphore, #tpu.memory_space<semaphore_mem>> -> memref<!tpu.dma_semaphore, #tpu.memory_space<semaphore_mem>>
    tpu.wait_dma2 semaphore(%80 : memref<!tpu.dma_semaphore, #tpu.memory_space<semaphore_mem>>) src(%77 : memref<1x256xf32, #tpu.memory_space<any>>) dst(%78 : memref<1x256xf32, #tpu.memory_space<vmem>>)
    %c6_i32_56 = arith.constant 6 : i32
    %c0_i32_57 = arith.constant 0 : i32
    %81 = tpu.memref_slice %arg2[%45, %c0_i32_57] : memref<1001x256xf32, #tpu.memory_space<any>> -> memref<1x256xf32, #tpu.memory_space<any>>
    %c6_i32_58 = arith.constant 6 : i32
    %c0_i32_59 = arith.constant 0 : i32
    %82 = tpu.memref_slice %arg3[%c6_i32_58, %c0_i32_59] : memref<8x256xf32, #tpu.memory_space<vmem>> -> memref<1x256xf32, #tpu.memory_space<vmem>>
    %83 = tpu.memref_slice %arg4[%c6_i32_56] : memref<8x!tpu.dma_semaphore, #tpu.memory_space<semaphore_mem>> -> memref<1x!tpu.dma_semaphore, #tpu.memory_space<semaphore_mem>>
    %84 = tpu.memref_squeeze %83 : memref<1x!tpu.dma_semaphore, #tpu.memory_space<semaphore_mem>> -> memref<!tpu.dma_semaphore, #tpu.memory_space<semaphore_mem>>
    tpu.wait_dma2 semaphore(%84 : memref<!tpu.dma_semaphore, #tpu.memory_space<semaphore_mem>>) src(%81 : memref<1x256xf32, #tpu.memory_space<any>>) dst(%82 : memref<1x256xf32, #tpu.memory_space<vmem>>)
    %c7_i32_60 = arith.constant 7 : i32
    %c0_i32_61 = arith.constant 0 : i32
    %85 = tpu.memref_slice %arg2[%52, %c0_i32_61] : memref<1001x256xf32, #tpu.memory_space<any>> -> memref<1x256xf32, #tpu.memory_space<any>>
    %c7_i32_62 = arith.constant 7 : i32
    %c0_i32_63 = arith.constant 0 : i32
    %86 = tpu.memref_slice %arg3[%c7_i32_62, %c0_i32_63] : memref<8x256xf32, #tpu.memory_space<vmem>> -> memref<1x256xf32, #tpu.memory_space<vmem>>
    %87 = tpu.memref_slice %arg4[%c7_i32_60] : memref<8x!tpu.dma_semaphore, #tpu.memory_space<semaphore_mem>> -> memref<1x!tpu.dma_semaphore, #tpu.memory_space<semaphore_mem>>
    %88 = tpu.memref_squeeze %87 : memref<1x!tpu.dma_semaphore, #tpu.memory_space<semaphore_mem>> -> memref<!tpu.dma_semaphore, #tpu.memory_space<semaphore_mem>>
    tpu.wait_dma2 semaphore(%88 : memref<!tpu.dma_semaphore, #tpu.memory_space<semaphore_mem>>) src(%85 : memref<1x256xf32, #tpu.memory_space<any>>) dst(%86 : memref<1x256xf32, #tpu.memory_space<vmem>>)
    return
  }
  func.func @transform_1(%arg0: i32, %arg1: memref<8xi32, #tpu.memory_space<smem>>) -> (i32, i32) {
    %c0_i32 = arith.constant 0 : i32
    %c0_i32_0 = arith.constant 0 : i32
    return %arg0, %c0_i32 : i32, i32
  }
}

</mosaic_0001>

<llo_original>
// kernel: tpu_custom_call.1
$region0: #{tpu_custom_call.1}
  #allocation0 [shape = 'u32[]', space=smem, size = 0x4, offset = 0x4, fixed_abs, tag = 'smem constant byte address 0x4 - core index']
  #allocation1 [shape = 'u32[144,128]{1,0:T(1,128)}', space=vmem, size = 0x12000, scoped, tag = 'internal scratch']
  #allocation2 [shape = 's32[8]{0}', space=sflag, size = 0x20, scoped, tag = 'scratch operand']
  #allocation3 [shape = 's32[1]{0}', space=sflag, size = 0x4, scoped, tag = 'scoped memory for tpu_custom_call.1']
  #allocation4 [shape = 'u8[512]{0}', space=smem, size = 0x200, scoped, tag = 'prefetched SMEM operand 0']
  #allocation7 [shape = 's32[]', space=sflag, size = 0x4, offset = 0, fixed_abs, tag = 'sflag constant byte address 0x0 - dummy sync flag']
  #allocation8 [shape = 's32[]', space=sflag, size = 0x4, offset = 0, fixed_abs, tag = 'sflag constant byte address 0x0 - dummy sync flag']
  #allocation9 [shape = 's32[]', space=sflag, size = 0x4, offset = 0, fixed_abs, tag = 'sflag constant byte address 0x0 - dummy sync flag']
  #allocation10 [shape = 's32[]', space=sflag, size = 0x4, offset = 0, fixed_abs, tag = 'sflag constant byte address 0x0 - dummy sync flag']
  #allocation11 [shape = 's32[]', space=sflag, size = 0x4, offset = 0, fixed_abs, tag = 'sflag constant byte address 0x0 - dummy sync flag']
  #allocation12 [shape = 's32[]', space=sflag, size = 0x4, offset = 0, fixed_abs, tag = 'sflag constant byte address 0x0 - dummy sync flag']
  #allocation13 [shape = 's32[]', space=sflag, size = 0x4, offset = 0, fixed_abs, tag = 'sflag constant byte address 0x0 - dummy sync flag']
  #allocation14 [shape = 's32[]', space=sflag, size = 0x4, offset = 0, fixed_abs, tag = 'sflag constant byte address 0x0 - dummy sync flag']
  %s0 = inlined_call_operand.hbm [shape: s32[8], index: 0, kind: input, shape index: {}]
  %s1 = inlined_call_operand.hbm [shape: f32[1001,256], index: 1, kind: input, shape index: {}]
  %s2 = inlined_call_operand.hbm [shape: f32[8,256], index: 2, kind: output, shape index: {}]
  %s3 = sld [smem:[#allocation0]]
  $region10: #{tpu_custom_call.1} parent=0
    _
  %s5 = ssub.s32 1, %s3
  %s6 = scalar_select 0, %s5, %s3
  %8 = dma.hbm_to_smem %s0, 16, [#allocation4], [#allocation3]
  %9 = dma.done [#allocation3], 16
  %10 = sfence
  $region1: #{tpu_custom_call.1} parent=0
    #allocation5 [shape = 'u8[8192]{0}', space=vmem, size = 0x2000, scoped, tag = 'output window, operand 0, single buffered']
    #allocation6 [shape = 's32[1]{0}', space=sflag, size = 0x4, scoped, tag = 'scoped memory for tpu_custom_call.1']
    %11 = vsyncpa [#allocation6], 0
    %s12 = smul.u32 0, 8
    %s13 = sld [smem:[#allocation4 + %s12]]
    %s14 = sshrl.u32 %s13, 3
    %s15 = sand.u32 %s13, 7
    %s16 = smul.u32 %s14, 16
    %s17 = sadd.s32 %s15, %s16
    %s18 = smul.addr %s17, 16
    %s19 = scalar_lea.hbm %s1, %s18
    %s21 = sshll.u32 [#allocation5], 4
    %s22 = int_to_ptr.vmem [resolvable:$true] %s21
    %24 = dma.hbm_to_vmem [thread:$0]  %s19, 32, %s22, [#allocation2], 128, 128, 1
    %s25 = sadd.s32 %s12, 1
    %s26 = sld [smem:[#allocation4 + %s25]]
    %s27 = sshrl.u32 %s26, 3
    %s28 = sand.u32 %s26, 7
    %s29 = smul.u32 %s27, 16
    %s30 = sadd.s32 %s28, %s29
    %s31 = smul.addr %s30, 16
    %s32 = scalar_lea.hbm %s1, %s31
    %s33 = scalar_lea.vmem [#allocation5], 1
    %s34 = scalar_lea.sflag [#allocation2], 1
    %s36 = sshll.u32 %s33, 4
    %s37 = int_to_ptr.vmem [resolvable:$true] %s36
    %39 = dma.hbm_to_vmem [thread:$0]  %s32, 32, %s37, %s34, 128, 128, 1
    %s40 = sadd.s32 %s12, 2
    %s41 = sld [smem:[#allocation4 + %s40]]
    %s42 = sshrl.u32 %s41, 3
    %s43 = sand.u32 %s41, 7
    %s44 = smul.u32 %s42, 16
    %s45 = sadd.s32 %s43, %s44
    %s46 = smul.addr %s45, 16
    %s47 = scalar_lea.hbm %s1, %s46
    %s48 = scalar_lea.vmem [#allocation5], 2
    %s49 = scalar_lea.sflag [#allocation2], 2
    %s51 = sshll.u32 %s48, 4
    %s52 = int_to_ptr.vmem [resolvable:$true] %s51
    %54 = dma.hbm_to_vmem [thread:$0]  %s47, 32, %s52, %s49, 128, 128, 1
    %s55 = sadd.s32 %s12, 3
    %s56 = sld [smem:[#allocation4 + %s55]]
    %s57 = sshrl.u32 %s56, 3
    %s58 = sand.u32 %s56, 7
    %s59 = smul.u32 %s57, 16
    %s60 = sadd.s32 %s58, %s59
    %s61 = smul.addr %s60, 16
    %s62 = scalar_lea.hbm %s1, %s61
    %s63 = scalar_lea.vmem [#allocation5], 3
    %s64 = scalar_lea.sflag [#allocation2], 3
    %s66 = sshll.u32 %s63, 4
    %s67 = int_to_ptr.vmem [resolvable:$true] %s66
    %69 = dma.hbm_to_vmem [thread:$0]  %s62, 32, %s67, %s64, 128, 128, 1
    %s70 = sadd.s32 %s12, 4
    %s71 = sld [smem:[#allocation4 + %s70]]
    %s72 = sshrl.u32 %s71, 3
    %s73 = sand.u32 %s71, 7
    %s74 = smul.u32 %s72, 16
    %s75 = sadd.s32 %s73, %s74
    %s76 = smul.addr %s75, 16
    %s77 = scalar_lea.hbm %s1, %s76
    %s78 = scalar_lea.vmem [#allocation5], 4
    %s79 = scalar_lea.sflag [#allocation2], 4
    %s81 = sshll.u32 %s78, 4
    %s82 = int_to_ptr.vmem [resolvable:$true] %s81
    %84 = dma.hbm_to_vmem [thread:$0]  %s77, 32, %s82, %s79, 128, 128, 1
    %s85 = sadd.s32 %s12, 5
    %s86 = sld [smem:[#allocation4 + %s85]]
    %s87 = sshrl.u32 %s86, 3
    %s88 = sand.u32 %s86, 7
    %s89 = smul.u32 %s87, 16
    %s90 = sadd.s32 %s88, %s89
    %s91 = smul.addr %s90, 16
    %s92 = scalar_lea.hbm %s1, %s91
    %s93 = scalar_lea.vmem [#allocation5], 5
    %s94 = scalar_lea.sflag [#allocation2], 5
    %s96 = sshll.u32 %s93, 4
    %s97 = int_to_ptr.vmem [resolvable:$true] %s96
    %99 = dma.hbm_to_vmem [thread:$0]  %s92, 32, %s97, %s94, 128, 128, 1
    %s100 = sadd.s32 %s12, 6
    %s101 = sld [smem:[#allocation4 + %s100]]
    %s102 = sshrl.u32 %s101, 3
    %s103 = sand.u32 %s101, 7
    %s104 = smul.u32 %s102, 16
    %s105 = sadd.s32 %s103, %s104
    %s106 = smul.addr %s105, 16
    %s107 = scalar_lea.hbm %s1, %s106
    %s108 = scalar_lea.vmem [#allocation5], 6
    %s109 = scalar_lea.sflag [#allocation2], 6
    %s111 = sshll.u32 %s108, 4
    %s112 = int_to_ptr.vmem [resolvable:$true] %s111
    %114 = dma.hbm_to_vmem [thread:$0]  %s107, 32, %s112, %s109, 128, 128, 1
    %s115 = sadd.s32 %s12, 7
    %s116 = sld [smem:[#allocation4 + %s115]]
    %s117 = sshrl.u32 %s116, 3
    %s118 = sand.u32 %s116, 7
    %s119 = smul.u32 %s117, 16
    %s120 = sadd.s32 %s118, %s119
    %s121 = smul.addr %s120, 16
    %s122 = scalar_lea.hbm %s1, %s121
    %s123 = scalar_lea.vmem [#allocation5], 7
    %s124 = scalar_lea.sflag [#allocation2], 7
    %s126 = sshll.u32 %s123, 4
    %s127 = int_to_ptr.vmem [resolvable:$true] %s126
    %129 = dma.hbm_to_vmem [thread:$0]  %s122, 32, %s127, %s124, 128, 128, 1
    %s130 = smul.u32 1, 2
    %s131 = sshll.u32 %s130, 4
    %132 = dma.done [#allocation2], %s131
    %s133 = sshll.u32 %s130, 4
    %134 = dma.done %s34, %s133
    %s135 = sshll.u32 %s130, 4
    %136 = dma.done %s49, %s135
    %s137 = sshll.u32 %s130, 4
    %138 = dma.done %s64, %s137
    %s139 = sshll.u32 %s130, 4
    %140 = dma.done %s79, %s139
    %s141 = sshll.u32 %s130, 4
    %142 = dma.done %s94, %s141
    %s143 = sshll.u32 %s130, 4
    %144 = dma.done %s109, %s143
    %s145 = sshll.u32 %s130, 4
    %146 = dma.done %s124, %s145
    // Predicated region
    $region2: #{tpu_custom_call.1} parent=1 // pred_check
      _
    $region3: #{tpu_custom_call.1} parent=1 // pred_check_branch
      %148 = sbr.rel (0) target = $region5
    $region4: #{tpu_custom_call.1} parent=1 // pred_region
      %s150 = ssub.s32 256, 256
      %151 = vsyncadd [#allocation6], %s150
      %s153 = sshll.u32 [#allocation5], 4
      %s154 = int_to_ptr.vmem [resolvable:$true] %s153
      %156 = dma.vmem_to_hbm [thread:$0]  %s154, 256, %s2, [#allocation6]
    $region5: #{tpu_custom_call.1} parent=1 // pred_fallthru
      _
    // Predicated region
    $region6: #{tpu_custom_call.1} parent=1 // pred_check
      _
    $region7: #{tpu_custom_call.1} parent=1 // pred_check_branch
      %158 = sbr.rel (0) target = $region9
    $region8: #{tpu_custom_call.1} parent=1 // pred_region
      %159 = dma.done [#allocation6], 256
    $region9: #{tpu_custom_call.1} parent=1 // pred_fallthru
      _
    %160 = vsyncpa [#allocation6], 1
  %161 = vsyncmov [#allocation2]
  %s162 = vpop.sfrf %161
  %p163 = scmp.eq.s32.totalorder %s162, 0
  %p164 = pneg %p163
  %166 = shalt.err (%p164)
  %s167 = scalar_lea.sflag [#allocation2], 1
  %168 = vsyncmov %s167
  %s169 = vpop.sfrf %168
  %p170 = scmp.eq.s32.totalorder %s169, 0
  %p171 = pneg %p170
  %173 = shalt.err (%p171)
  %s174 = scalar_lea.sflag [#allocation2], 2
  %175 = vsyncmov %s174
  %s176 = vpop.sfrf %175
  %p177 = scmp.eq.s32.totalorder %s176, 0
  %p178 = pneg %p177
  %180 = shalt.err (%p178)
  %s181 = scalar_lea.sflag [#allocation2], 3
  %182 = vsyncmov %s181
  %s183 = vpop.sfrf %182
  %p184 = scmp.eq.s32.totalorder %s183, 0
  %p185 = pneg %p184
  %187 = shalt.err (%p185)
  %s188 = scalar_lea.sflag [#allocation2], 4
  %189 = vsyncmov %s188
  %s190 = vpop.sfrf %189
  %p191 = scmp.eq.s32.totalorder %s190, 0
  %p192 = pneg %p191
  %194 = shalt.err (%p192)
  %s195 = scalar_lea.sflag [#allocation2], 5
  %196 = vsyncmov %s195
  %s197 = vpop.sfrf %196
  %p198 = scmp.eq.s32.totalorder %s197, 0
  %p199 = pneg %p198
  %201 = shalt.err (%p199)
  %s202 = scalar_lea.sflag [#allocation2], 6
  %203 = vsyncmov %s202
  %s204 = vpop.sfrf %203
  %p205 = scmp.eq.s32.totalorder %s204, 0
  %p206 = pneg %p205
  %208 = shalt.err (%p206)
  %s209 = scalar_lea.sflag [#allocation2], 7
  %210 = vsyncmov %s209
  %s211 = vpop.sfrf %210
  %p212 = scmp.eq.s32.totalorder %s211, 0
  %p213 = pneg %p212
  %215 = shalt.err (%p213)

</llo_original>
